<compile_context>
chip_gen: v5e
topology: v5e:2x2
jax: 0.10.0
libtpu: 0.0.40
codegen_flags: <defaults>
</compile_context>

<pallas_src>
import jax
import jax.numpy as jnp
from jax.experimental import pallas as pl
from jax.experimental.pallas import tpu as pltpu

EPS = 1e-7
_MAX_ROW_TILE = 4096  # rows per grid step (VMEM footprint ~16 MiB double-buffered)


def _round_up(x, m):
    return ((x + m - 1) // m) * m


def _masked_mse_kernel(pred_ref, tgt_ref, mask_ref, out_ref):
    # pred_ref / tgt_ref / mask_ref: (bm, M) tiles, native (B, M) layout.
    # out_ref: (bm, 1) f32 per-sample masked-MSE.
    pred = pred_ref[...].astype(jnp.float32)   # cast on vregs (free VPU work)
    tgt = tgt_ref[...].astype(jnp.float32)
    mask = mask_ref[...].astype(jnp.float32)

    diff = pred - tgt
    num = jnp.sum(diff * diff * mask, axis=-1, keepdims=True)  # (bm, 1) XLU reduce
    den = jnp.sum(mask, axis=-1, keepdims=True) + EPS          # (bm, 1)
    out_ref[...] = num / den                                    # exact divide (memory-bound => free)


def infectiousness_loss(predicted_infectiousness_history,
                        infectiousness_history,
                        valid_history_mask,
                        sample_weight=None):
    """predicted_infectiousness_history: (B, M, 1) float (f32 or bf16)
       infectiousness_history:           (B, M, 1) float
       valid_history_mask:               (B, M)    0/1 mask (f32 / bf16 / int8 / bool)
       sample_weight:                    optional (B,) weights
    """
    assert predicted_infectiousness_history.ndim == 3
    assert predicted_infectiousness_history.shape[-1] == 1
    assert infectiousness_history.ndim == 3 and infectiousness_history.shape[-1] == 1
    assert valid_history_mask.ndim == 2

    B, M, _ = predicted_infectiousness_history.shape

    # Dropping the trailing size-1 channel dim of a contiguous array is a
    # metadata-only reshape (no HBM copy).
    pred = predicted_infectiousness_history[..., 0]   # (B, M)
    tgt = infectiousness_history[..., 0]              # (B, M)
    mask = valid_history_mask                         # (B, M)

    # Batch tile on the sublane axis: multiple of 8 (or the full B when tiny),
    # capped for VMEM, and split into >= 2 grid steps when possible so the
    # "parallel" axis can shard across v7x's 2 TensorCores.
    if B <= 8:
        bm = B
    elif B <= _MAX_ROW_TILE:
        bm = min(_round_up(pl.cdiv(B, 2), 8), _round_up(B, 8))
    else:
        bm = _MAX_ROW_TILE
    grid = (pl.cdiv(B, bm),)   # partial tail block handled by Pallas (no jnp.pad)

    # Explicit VMEM budget, counting the lane padding (M -> 128) of each tile.
    m_lanes = _round_up(M, 128)
    bm_pad = _round_up(bm, 8)
    in_tile_bytes = bm_pad * m_lanes * (pred.dtype.itemsize
                                        + tgt.dtype.itemsize
                                        + mask.dtype.itemsize)
    out_tile_bytes = bm_pad * 128 * 4
    vmem_need = 2 * (in_tile_bytes + out_tile_bytes)           # double-buffered
    vmem_limit = int(min(max(vmem_need + (2 << 20), 8 << 20), 32 << 20))

    cost = pl.CostEstimate(
        flops=int(5 * B * M),
        transcendentals=0,
        bytes_accessed=int(B * M * (pred.dtype.itemsize
                                    + tgt.dtype.itemsize
                                    + mask.dtype.itemsize) + B * 4),
    )

    per_sample = pl.pallas_call(
        _masked_mse_kernel,
        out_shape=jax.ShapeDtypeStruct((B, 1), jnp.float32),
        grid=grid,
        in_specs=[
            pl.BlockSpec((bm, M), lambda i: (i, 0)),
            pl.BlockSpec((bm, M), lambda i: (i, 0)),
            pl.BlockSpec((bm, M), lambda i: (i, 0)),
        ],
        out_specs=pl.BlockSpec((bm, 1), lambda i: (i, 0)),
        compiler_params=pltpu.CompilerParams(
            dimension_semantics=("parallel",),   # batch tiles are independent
            vmem_limit_bytes=vmem_limit,
        ),
        cost_estimate=cost,
    )(pred, tgt, mask)

    per_sample = per_sample[:, 0]                         # (B,)
    if sample_weight is None:
        return jnp.mean(per_sample)
    return jnp.mean(per_sample * sample_weight.astype(jnp.float32))


def _reference(pred, tgt, mask):
    pred2 = pred[..., 0].astype(jnp.float32)
    tgt2 = tgt[..., 0].astype(jnp.float32)
    m = mask.astype(jnp.float32)
    sq = (pred2 - tgt2) ** 2
    per = jnp.sum(sq * m, axis=-1) / (jnp.sum(m, axis=-1) + EPS)
    return jnp.mean(per)


if __name__ == "__main__":
    B, M = 4, 16  # batch, history length (set-valued temporal axis); C = 1
    key = jax.random.PRNGKey(0)
    k1, k2, k3 = jax.random.split(key, 3)

    predicted = jax.random.normal(k1, (B, M, 1), dtype=jnp.float32)
    target = jax.random.normal(k2, (B, M, 1), dtype=jnp.float32)
    mask = (jax.random.uniform(k3, (B, M)) > 0.3).astype(jnp.float32)

    loss = infectiousness_loss(predicted, target, mask)
    loss = jax.block_until_ready(loss)

    ref = _reference(predicted, target, mask)
    assert jnp.allclose(loss, ref, atol=1e-6, rtol=1e-5), (loss, ref)

    print("KERNEL_OK")
</pallas_src>

<mosaic_0001>
module attributes {stable_mosaic.version = 11 : i64} {
  func.func @_masked_mse_kernel(%arg0: i32, %arg1: memref<4x16xf32, #tpu.memory_space<vmem>>, %arg2: memref<4x16xf32, #tpu.memory_space<vmem>>, %arg3: memref<4x16xf32, #tpu.memory_space<vmem>>, %arg4: memref<4x1xf32, #tpu.memory_space<vmem>>) attributes {dimension_semantics = [#tpu.dimension_semantics<parallel>], iteration_bounds = array<i64: 1>, scalar_prefetch = 0 : i64, scratch_operands = 0 : i64, tpu.core_type = #tpu.core_type<tc>, window_params = [{transform_indices = @transform_0, window_bounds = array<i64: 4, 16>}, {transform_indices = @transform_1, window_bounds = array<i64: 4, 16>}, {transform_indices = @transform_2, window_bounds = array<i64: 4, 16>}, {transform_indices = @transform_3, window_bounds = array<i64: 4, 1>}]} {
    %c0 = arith.constant 0 : index
    %c0_0 = arith.constant 0 : index
    %0 = vector.load %arg1[%c0, %c0_0] : memref<4x16xf32, #tpu.memory_space<vmem>>, vector<4x16xf32>
    %c0_1 = arith.constant 0 : index
    %c0_2 = arith.constant 0 : index
    %1 = vector.load %arg2[%c0_1, %c0_2] : memref<4x16xf32, #tpu.memory_space<vmem>>, vector<4x16xf32>
    %c0_3 = arith.constant 0 : index
    %c0_4 = arith.constant 0 : index
    %2 = vector.load %arg3[%c0_3, %c0_4] : memref<4x16xf32, #tpu.memory_space<vmem>>, vector<4x16xf32>
    %3 = arith.subf %0, %1 : vector<4x16xf32>
    %4 = arith.mulf %3, %3 : vector<4x16xf32>
    %5 = arith.mulf %4, %2 : vector<4x16xf32>
    %cst = arith.constant dense<0.000000e+00> : vector<4xf32>
    %6 = vector.multi_reduction <add>, %5, %cst [1] : vector<4x16xf32> to vector<4xf32>
    %7 = vector.shape_cast %6 : vector<4xf32> to vector<4x1xf32>
    %cst_5 = arith.constant dense<0.000000e+00> : vector<4xf32>
    %8 = vector.multi_reduction <add>, %2, %cst_5 [1] : vector<4x16xf32> to vector<4xf32>
    %9 = vector.shape_cast %8 : vector<4xf32> to vector<4x1xf32>
    %cst_6 = arith.constant 1.000000e-07 : f32
    %10 = vector.broadcast %cst_6 : f32 to vector<4x1xf32>
    %11 = arith.addf %9, %10 : vector<4x1xf32>
    %12 = arith.divf %7, %11 : vector<4x1xf32>
    %c0_7 = arith.constant 0 : index
    %c0_8 = arith.constant 0 : index
    %13 = vector.load %arg4[%c0_7, %c0_8] : memref<4x1xf32, #tpu.memory_space<vmem>>, vector<4x1xf32>
    tpu.vector_store %arg4[%c0_7, %c0_8], %12 {strides = array<i32>} : memref<4x1xf32, #tpu.memory_space<vmem>>, vector<4x1xf32>,
    return
  }
  func.func @transform_0(%arg0: i32) -> (i32, i32) {
    %c0_i32 = arith.constant 0 : i32
    %c0_i32_0 = arith.constant 0 : i32
    return %arg0, %c0_i32 : i32, i32
  }
  func.func @transform_1(%arg0: i32) -> (i32, i32) {
    %c0_i32 = arith.constant 0 : i32
    %c0_i32_0 = arith.constant 0 : i32
    return %arg0, %c0_i32 : i32, i32
  }
  func.func @transform_2(%arg0: i32) -> (i32, i32) {
    %c0_i32 = arith.constant 0 : i32
    %c0_i32_0 = arith.constant 0 : i32
    return %arg0, %c0_i32 : i32, i32
  }
  func.func @transform_3(%arg0: i32) -> (i32, i32) {
    %c0_i32 = arith.constant 0 : i32
    %c0_i32_0 = arith.constant 0 : i32
    return %arg0, %c0_i32 : i32, i32
  }
}

</mosaic_0001>

<llo_original>
// kernel: tpu_custom_call.1
$region0: #{tpu_custom_call.1}
  #allocation0 [shape = 'u32[]', space=smem, size = 0x4, offset = 0x4, fixed_abs, tag = 'smem constant byte address 0x4 - core index']
  #allocation1 [shape = 'u32[72,128]{1,0:T(1,128)}', space=vmem, size = 0x9000, scoped, tag = 'internal scratch']
  %s0 = inlined_call_operand.hbm [shape: f32[4,16], index: 0, kind: input, shape index: {}]
  %s1 = inlined_call_operand.hbm [shape: f32[4,16], index: 1, kind: input, shape index: {}]
  %s2 = inlined_call_operand.hbm [shape: f32[4,16], index: 2, kind: input, shape index: {}]
  %s3 = inlined_call_operand.vmem [shape: f32[4,1], index: 3, kind: output, shape index: {}]
  %s4 = sld [smem:[#allocation0]]
  $region34: #{tpu_custom_call.1} parent=0
    _
  %s6 = ssub.s32 1, %s4
  %s7 = scalar_select 0, %s6, %s4
  $region1: #{tpu_custom_call.1} parent=0
    #allocation2 [shape = 'u8[2048]{0}', space=vmem, size = 0x800, scoped, tag = 'input window, operand 0, single buffered']
    #allocation3 [shape = 's32[1]{0}', space=sflag, size = 0x4, scoped, tag = 'scoped memory for tpu_custom_call.1']
    #allocation4 [shape = 'u8[2048]{0}', space=vmem, size = 0x800, scoped, tag = 'input window, operand 1, single buffered']
    #allocation5 [shape = 's32[1]{0}', space=sflag, size = 0x4, scoped, tag = 'scoped memory for tpu_custom_call.1']
    #allocation6 [shape = 'u8[2048]{0}', space=vmem, size = 0x800, scoped, tag = 'input window, operand 2, single buffered']
    %8 = vsyncpa [#allocation3], 0
    %9 = vsyncpa [#allocation5], 0
    // Predicated region
    $region2: #{tpu_custom_call.1} parent=1 // pred_check
      _
    $region3: #{tpu_custom_call.1} parent=1 // pred_check_branch
      %11 = sbr.rel (0) target = $region5
    $region4: #{tpu_custom_call.1} parent=1 // pred_region
      %13 = vsyncadd [#allocation3], 0
      %s15 = sshll.u32 %s0, 4
      %s16 = int_to_ptr.hbm [resolvable:$true] %s15
      %s17 = sshll.u32 [#allocation2], 4
      %s18 = int_to_ptr.vmem [resolvable:$true] %s17
      %20 = dma.hbm_to_vmem [thread:$0]  %s16, 64, %s18, [#allocation3]
    $region5: #{tpu_custom_call.1} parent=1 // pred_fallthru
      _
    // Predicated region
    $region6: #{tpu_custom_call.1} parent=1 // pred_check
      _
    $region7: #{tpu_custom_call.1} parent=1 // pred_check_branch
      %22 = sbr.rel (0) target = $region9
    $region8: #{tpu_custom_call.1} parent=1 // pred_region
      %24 = vsyncadd [#allocation5], 0
      %s26 = sshll.u32 %s1, 4
      %s27 = int_to_ptr.hbm [resolvable:$true] %s26
      %s28 = sshll.u32 [#allocation4], 4
      %s29 = int_to_ptr.vmem [resolvable:$true] %s28
      %31 = dma.hbm_to_vmem [thread:$0]  %s27, 64, %s29, [#allocation5]
    $region9: #{tpu_custom_call.1} parent=1 // pred_fallthru
      _
    // Predicated region
    $region10: #{tpu_custom_call.1} parent=1 // pred_check
      _
    $region11: #{tpu_custom_call.1} parent=1 // pred_check_branch
      %33 = sbr.rel (0) target = $region13
    $region12: #{tpu_custom_call.1} parent=1 // pred_region
      %35 = vsyncadd [#allocation5], 0
      %s37 = sshll.u32 %s2, 4
      %s38 = int_to_ptr.hbm [resolvable:$true] %s37
      %s39 = sshll.u32 [#allocation6], 4
      %s40 = int_to_ptr.vmem [resolvable:$true] %s39
      %42 = dma.hbm_to_vmem [thread:$0]  %s38, 64, %s40, [#allocation5]
    $region13: #{tpu_custom_call.1} parent=1 // pred_fallthru
      _
    // Predicated region
    $region14: #{tpu_custom_call.1} parent=1 // pred_check
      _
    $region15: #{tpu_custom_call.1} parent=1 // pred_check_branch
      %44 = sbr.rel (0) target = $region17
    $region16: #{tpu_custom_call.1} parent=1 // pred_region
      %46 = dma.done [#allocation3], 64
    $region17: #{tpu_custom_call.1} parent=1 // pred_fallthru
      _
    // Predicated region
    $region18: #{tpu_custom_call.1} parent=1 // pred_check
      _
    $region19: #{tpu_custom_call.1} parent=1 // pred_check_branch
      %48 = sbr.rel (0) target = $region21
    $region20: #{tpu_custom_call.1} parent=1 // pred_region
      %50 = dma.done [#allocation5], 64
    $region21: #{tpu_custom_call.1} parent=1 // pred_fallthru
      _
    // Predicated region
    $region22: #{tpu_custom_call.1} parent=1 // pred_check
      _
    $region23: #{tpu_custom_call.1} parent=1 // pred_check_branch
      %52 = sbr.rel (0) target = $region25
    $region24: #{tpu_custom_call.1} parent=1 // pred_region
      %54 = dma.done [#allocation5], 64
    $region25: #{tpu_custom_call.1} parent=1 // pred_fallthru
      _
    %v55 = vld [vmem:[#allocation2] sm:$0xf]
    %v56 = vld [vmem:[#allocation4] sm:$0xf]
    %v57 = vld [vmem:[#allocation6] sm:$0xf]
    %v58 = vsub.f32 %v55, %v56
    %v59 = vmul.f32 %v58, %v58
    %v60 = vmul.f32 %v59, %v57
    %vm61 = vcmask 125952
    %v62 = vsel %vm61, %v60, 0.0
    %63 = vadd.xlane.f32.xlu0 %v62
    %v64 = vpop.xlane.xlu0 %63
    %v65 = vsel %vm61, %v57, 0.0
    %66 = vadd.xlane.f32.xlu0 %v65
    %v67 = vpop.xlane.xlu0 %66
    %v68 = vadd.f32 %v67, 1e-07
    %v69 = vrcp.pop %v68
    %v70 = vmul.f32 %v68, %v69
    %v71 = vsub.f32 1.0, %v70
    %v72 = vmul.f32 %v69, %v71
    %v73 = vadd.f32 %v69, %v72
    %vm74 = vweird.f32 %v68
    %vm75 = vweird.f32 %v69
    %vm76 = vmor %vm74, %vm75
    %v77 = vsel %vm76, %v69, %v73
    %v78 = vand.u32 2147483647, %v68
    %vm79 = vcmp.eq.f32.partialorder %v78, 8.507059e+37
    %v80 = vand.u32 %v68, 2147483648
    %v81 = vor.u32 1.1754944e-38, %v80
    %v82 = vsel %vm79, %v81, %v77
    %v83 = vmul.f32 %v64, %v82
    %vm84 = vcmask 3072
    %85 = vst.msk [vmem:[%s3] sm:$0xf] %vm84, %v83
    // Predicated region
    $region26: #{tpu_custom_call.1} parent=1 // pred_check
      _
    $region27: #{tpu_custom_call.1} parent=1 // pred_check_branch
      %87 = sbr.rel (0) target = $region29
    $region28: #{tpu_custom_call.1} parent=1 // pred_region
      _
    $region29: #{tpu_custom_call.1} parent=1 // pred_fallthru
      _
    // Predicated region
    $region30: #{tpu_custom_call.1} parent=1 // pred_check
      _
    $region31: #{tpu_custom_call.1} parent=1 // pred_check_branch
      %89 = sbr.rel (0) target = $region33
    $region32: #{tpu_custom_call.1} parent=1 // pred_region
      _
    $region33: #{tpu_custom_call.1} parent=1 // pred_fallthru
      _
    %90 = vsyncpa [#allocation3], 1
    %91 = vsyncpa [#allocation5], 1

</llo_original>
